<compile_context>
chip_gen: v5e
topology: v5e:2x2
jax: 0.10.0
libtpu: 0.0.40
codegen_flags: <defaults>
</compile_context>

<pallas_src>
import math

import jax
import jax.numpy as jnp
from jax.experimental import pallas as pl
from jax.experimental.pallas import tpu as pltpu

CLAMP_MIN = math.log10(1.0 + 0.1 / 140.0)  # ≈ 3.1003e-4
ROWPART_LANES = 128                        # lane-partial width for rowsum(|diff|)


# ----------------------------------------------------------------------------
# Tiling / VMEM heuristics
# ----------------------------------------------------------------------------
def _pipeline_budget_bytes() -> int:
    """HBM<->VMEM pipeline-buffer budget (inputs x 2 buffers)."""
    default = 16 * 1024 * 1024          # safe for v7x (64 MiB physical VMEM)
    try:
        cap = int(pltpu.get_tpu_info().vmem_capacity_bytes)
    except Exception:
        return default
    # ~1/4 of physical VMEM, capped: 16 MiB on v7x, 32 MiB on v5e / v6e.
    return int(min(32 * 1024 * 1024, max(8 * 1024 * 1024, cap // 4)))


def _min_sublane(*dtypes) -> int:
    """Minimum row-tile granularity given dtype sublane packing."""
    s = 8
    for dt in dtypes:
        item = jnp.dtype(dt).itemsize
        s = max(s, 8 * max(1, 4 // max(1, item)))   # f32->8, bf16->16, int8->32
    return s


def _pick_row_tile(m: int, itemsize_sum: int, min_sub: int, budget: int) -> int:
    """Largest divisor of M (multiple of min_sub) whose double-buffered input
    slabs fit the pipeline budget."""
    bytes_per_row = 2 * m * itemsize_sum            # 2 pipeline buffers / input
    max_rows = budget // max(1, bytes_per_row)
    hi = min(m, max_rows)
    hi -= hi % min_sub
    tm = hi
    while tm >= min_sub:
        if m % tm == 0:
            return tm
        tm -= min_sub
    # No exact divisor (e.g. M not a multiple of 8/16): single full block if it
    # comfortably fits in VMEM (block == full array dims is always legal).
    if 2 * m * m * itemsize_sum <= max(budget, 24 * 1024 * 1024):
        return m
    # TODO(synk): support large M with no multiple-of-8 divisor via a cdiv grid
    # and a masked tail tile (needs per-row validity masking of weights/count).
    raise ValueError(
        f"Weight_MAE Pallas kernel: M={m} has no row tile that fits VMEM "
        f"(budget={budget} bytes); pad M to a multiple of {min_sub}.")


# ----------------------------------------------------------------------------
# Kernel
# ----------------------------------------------------------------------------
def _lane_partial_rowsum(x, width=ROWPART_LANES):
    """Per-row partial sums reduced to `width` lanes using only vreg-column
    adds (no cross-lane XLU work, no relayout)."""
    tm, m = x.shape
    n_full = m // width
    rem = m - n_full * width
    if n_full == 0:
        acc = jnp.zeros((tm, width), jnp.float32)
    else:
        acc = x[:, 0:width]
        for c in range(1, n_full):
            acc = acc + x[:, c * width:(c + 1) * width]
    if rem:
        head = acc[:, :rem] + x[:, n_full * width:]
        acc = jnp.concatenate([head, acc[:, rem:]], axis=1)
    return acc


def weight_mae_kernel(yt_ref, yp_ref, colsum_ref, count_ref, rowsum_ref):
    i = pl.program_id(1)  # position along the row-tile (reduction) axis

    @pl.when(i == 0)
    def _init():
        colsum_ref[...] = jnp.zeros_like(colsum_ref)
        count_ref[...] = jnp.zeros_like(count_ref)

    yt = yt_ref[...].astype(jnp.float32)   # (TM, M)
    yp = yp_ref[...].astype(jnp.float32)   # (TM, M)

    # Fused mask: |y_pred*mask - y_true| is 0 wherever y_true == 0 (one compare
    # + one select).  The second compare (> 0) is semantically required for the
    # denominator and is a different predicate than == 0.
    absdiff = jnp.where(yt == 0.0, 0.0, jnp.abs(yp - yt))
    # weights = clamp(y_true, log10(1 + 0.1/140), 1)
    weights = jnp.clip(yt, CLAMP_MIN, 1.0)
    # contribution to num = count of strictly positive y_true
    ispos = jnp.where(yt > 0.0, 1.0, 0.0)

    tm, m = yt.shape
    if tm % 8 == 0:
        # Reduce rows only down to the 8 sublanes with dense vreg adds; the
        # final 8->1 (XLU) reduce happens once, in the wrapper.
        colsum_ref[...] += weights.reshape(tm // 8, 8, m).sum(axis=0)
        count_ref[...] += ispos.reshape(tm // 8, 8, m).sum(axis=0)
    else:  # full-block fallback path for M not a multiple of 8
        colsum_ref[0:1, :] += jnp.sum(weights, axis=0, keepdims=True)
        count_ref[0:1, :] += jnp.sum(ispos, axis=0, keepdims=True)

    # Per-row lane partials of rowsum(|diff|): dense 128-lane store per tile.
    rowsum_ref[...] = _lane_partial_rowsum(absdiff)


# ----------------------------------------------------------------------------
# Wrapper
# ----------------------------------------------------------------------------
def weight_mae(y_true, y_pred, *, row_tile=None):
    if (y_true.ndim != 2 or y_true.shape != y_pred.shape
            or y_true.shape[0] != y_true.shape[1]):
        raise ValueError("Weight_MAE expects two square matrices of equal shape")
    M = y_true.shape[0]

    itemsize_sum = jnp.dtype(y_true.dtype).itemsize + jnp.dtype(y_pred.dtype).itemsize
    min_sub = _min_sublane(y_true.dtype, y_pred.dtype)
    budget = _pipeline_budget_bytes()

    if row_tile is None:
        tm = _pick_row_tile(M, itemsize_sum, min_sub, budget)
    else:
        tm = int(row_tile)
        if M % tm != 0:
            raise ValueError("row_tile must divide M")

    n_tiles = M // tm
    # Dual-TensorCore split (v7x); sequential (and harmless) on v5e / v6e.
    nc = 2 if (n_tiles >= 2 and n_tiles % 2 == 0) else 1
    per_core = n_tiles // nc

    def row_map(c, i):
        return (c * per_core + i, 0)

    def acc_map(c, i):
        return (c, 0)

    # VMEM footprint: double-buffered inputs + resident accumulator outputs
    # + the per-tile rowsum output block (double-buffered).
    vmem_needed = (2 * tm * M * itemsize_sum
                   + 2 * 2 * 8 * M * 4
                   + 2 * tm * ROWPART_LANES * 4)
    vmem_limit = int(min(64 * 1024 * 1024,
                         max(32 * 1024 * 1024, vmem_needed + 4 * 1024 * 1024)))

    colsum_out, count_out, rowsum_out = pl.pallas_call(
        weight_mae_kernel,
        out_shape=(
            jax.ShapeDtypeStruct((8 * nc, M), jnp.float32),             # colsum(weights)
            jax.ShapeDtypeStruct((8 * nc, M), jnp.float32),             # count(y_true > 0)
            jax.ShapeDtypeStruct((M, ROWPART_LANES), jnp.float32),      # rowsum(|diff|) partials
        ),
        grid=(nc, per_core),
        in_specs=[
            pl.BlockSpec((tm, M), row_map),
            pl.BlockSpec((tm, M), row_map),
        ],
        out_specs=(
            pl.BlockSpec((8, M), acc_map),
            pl.BlockSpec((8, M), acc_map),
            pl.BlockSpec((tm, ROWPART_LANES), row_map),
        ),
        compiler_params=pltpu.CompilerParams(
            dimension_semantics=("parallel", "arbitrary"),
            vmem_limit_bytes=vmem_limit,
        ),
    )(y_true, y_pred)   # native dtype in; per-tile cast inside the kernel

    # Tiny combine (runs once, on small arrays) — kept out of the kernel so the
    # v7x dual-core partials can be merged.  Elementwise ops only (full f32).
    colsum = jnp.sum(colsum_out, axis=0)                       # (M,)
    rowsum = jnp.sum(rowsum_out, axis=1)                       # (M,)
    total = jnp.sum(colsum * rowsum)                           # == sum(W @ |diff|)
    # Exact integer count (int32 is exact up to M ~ 46k; matches torch's len()).
    num = jnp.sum(count_out.astype(jnp.int32))
    # NOTE: num == 0 yields inf/nan, matching the PyTorch reference.
    return total / num.astype(jnp.float32)


def weight_mae_ref(y_true, y_pred):
    """Pure-JAX reference matching the PyTorch forward."""
    num = jnp.sum(y_true > 0).astype(jnp.float32)
    mask = jnp.where(y_true == 0.0, 0.0, 1.0)
    yp = y_pred * mask
    weights = jnp.clip(y_true, CLAMP_MIN, 1.0)
    prod = jnp.matmul(weights, jnp.abs(yp - y_true),
                      precision=jax.lax.Precision.HIGHEST)
    return jnp.sum(prod) / num


if __name__ == "__main__":
    M = 256
    key = jax.random.PRNGKey(0)
    k1, k2, k3 = jax.random.split(key, 3)

    # y_true: values in [0, 1) with ~30% exact zeros (log-scaled-target style)
    yt = jax.random.uniform(k1, (M, M), dtype=jnp.float32)
    zero_mask = jax.random.uniform(k2, (M, M), dtype=jnp.float32) < 0.3
    y_true = jnp.where(zero_mask, 0.0, yt)
    y_pred = jax.random.uniform(k3, (M, M), dtype=jnp.float32)

    expected = weight_mae_ref(y_true, y_pred)

    # Multi-tile path: row_tile=64 -> 4 tiles -> grid (2, 2); exercises the
    # parallel core split, init/accumulate, and per-tile rowsum blocks.
    r_multi = weight_mae(y_true, y_pred, row_tile=64)
    jax.block_until_ready(r_multi)
    assert jnp.allclose(r_multi, expected, rtol=1e-3, atol=1e-5), (r_multi, expected)

    # Default (auto) tiling path (single full block at this size).
    r_auto = weight_mae(y_true, y_pred)
    jax.block_until_ready(r_auto)
    assert jnp.allclose(r_auto, expected, rtol=1e-3, atol=1e-5), (r_auto, expected)

    print("KERNEL_OK")
</pallas_src>

<mosaic_0001>
module attributes {stable_mosaic.version = 11 : i64} {
  func.func @weight_mae_kernel(%arg0: i32, %arg1: i32, %arg2: memref<64x256xf32, #tpu.memory_space<vmem>>, %arg3: memref<64x256xf32, #tpu.memory_space<vmem>>, %arg4: memref<8x256xf32, #tpu.memory_space<vmem>>, %arg5: memref<8x256xf32, #tpu.memory_space<vmem>>, %arg6: memref<64x128xf32, #tpu.memory_space<vmem>>) attributes {dimension_semantics = [#tpu.dimension_semantics<parallel>, #tpu.dimension_semantics<arbitrary>], iteration_bounds = array<i64: 2, 2>, scalar_prefetch = 0 : i64, scratch_operands = 0 : i64, tpu.core_type = #tpu.core_type<tc>, window_params = [{transform_indices = @transform_0, window_bounds = array<i64: 64, 256>}, {transform_indices = @transform_1, window_bounds = array<i64: 64, 256>}, {transform_indices = @transform_2, window_bounds = array<i64: 8, 256>}, {transform_indices = @transform_3, window_bounds = array<i64: 8, 256>}, {transform_indices = @transform_4, window_bounds = array<i64: 64, 128>}]} {
    %c0_i32 = arith.constant 0 : i32
    %0 = arith.cmpi eq, %arg1, %c0_i32 : i32
    %1 = arith.extui %0 : i1 to i32
    %c0_i32_0 = arith.constant 0 : i32
    %2 = arith.cmpi ne, %1, %c0_i32_0 : i32
    scf.if %2 {
      %cst_22 = arith.constant 0.000000e+00 : f32
      %34 = vector.broadcast %cst_22 : f32 to vector<8x256xf32>
      %c0_23 = arith.constant 0 : index
      %c0_24 = arith.constant 0 : index
      %35 = vector.load %arg4[%c0_23, %c0_24] : memref<8x256xf32, #tpu.memory_space<vmem>>, vector<8x256xf32>
      tpu.vector_store %arg4[%c0_23, %c0_24], %34 {strides = array<i32>} : memref<8x256xf32, #tpu.memory_space<vmem>>, vector<8x256xf32>,
      %cst_25 = arith.constant 0.000000e+00 : f32
      %36 = vector.broadcast %cst_25 : f32 to vector<8x256xf32>
      %c0_26 = arith.constant 0 : index
      %c0_27 = arith.constant 0 : index
      %37 = vector.load %arg5[%c0_26, %c0_27] : memref<8x256xf32, #tpu.memory_space<vmem>>, vector<8x256xf32>
      tpu.vector_store %arg5[%c0_26, %c0_27], %36 {strides = array<i32>} : memref<8x256xf32, #tpu.memory_space<vmem>>, vector<8x256xf32>,
    } else {
    }
    %c0 = arith.constant 0 : index
    %c0_1 = arith.constant 0 : index
    %3 = vector.load %arg2[%c0, %c0_1] : memref<64x256xf32, #tpu.memory_space<vmem>>, vector<64x256xf32>
    %c0_2 = arith.constant 0 : index
    %c0_3 = arith.constant 0 : index
    %4 = vector.load %arg3[%c0_2, %c0_3] : memref<64x256xf32, #tpu.memory_space<vmem>>, vector<64x256xf32>
    %cst = arith.constant 0.000000e+00 : f32
    %5 = vector.broadcast %cst : f32 to vector<64x256xf32>
    %6 = arith.cmpf oeq, %3, %5 : vector<64x256xf32>
    %7 = arith.subf %4, %3 : vector<64x256xf32>
    %8 = math.absf %7 : vector<64x256xf32>
    %cst_4 = arith.constant 0.000000e+00 : f32
    %9 = vector.broadcast %cst_4 : f32 to vector<64x256xf32>
    %10 = arith.select %6, %9, %8 : vector<64x256xi1>, vector<64x256xf32>
    %cst_5 = arith.constant 3.10099596E-4 : f32
    %cst_6 = arith.constant 1.000000e+00 : f32
    %11 = vector.broadcast %cst_5 : f32 to vector<64x256xf32>
    %12 = arith.maximumf %11, %3 : vector<64x256xf32>
    %13 = vector.broadcast %cst_6 : f32 to vector<64x256xf32>
    %14 = arith.minimumf %13, %12 : vector<64x256xf32>
    %cst_7 = arith.constant 0.000000e+00 : f32
    %15 = vector.broadcast %cst_7 : f32 to vector<64x256xf32>
    %16 = arith.cmpf ogt, %3, %15 : vector<64x256xf32>
    %cst_8 = arith.constant 1.000000e+00 : f32
    %cst_9 = arith.constant 0.000000e+00 : f32
    %17 = vector.broadcast %cst_8 : f32 to vector<64x256xf32>
    %18 = vector.broadcast %cst_9 : f32 to vector<64x256xf32>
    %19 = arith.select %16, %17, %18 : vector<64x256xi1>, vector<64x256xf32>
    %c0_10 = arith.constant 0 : index
    %c0_11 = arith.constant 0 : index
    %20 = vector.load %arg4[%c0_10, %c0_11] : memref<8x256xf32, #tpu.memory_space<vmem>>, vector<8x256xf32>
    %21 = vector.shape_cast %14 : vector<64x256xf32> to vector<8x8x256xf32>
    %cst_12 = arith.constant dense<0.000000e+00> : vector<8x256xf32>
    %22 = vector.multi_reduction <add>, %21, %cst_12 [0] : vector<8x8x256xf32> to vector<8x256xf32>
    %23 = arith.addf %20, %22 : vector<8x256xf32>
    %c0_13 = arith.constant 0 : index
    %c0_14 = arith.constant 0 : index
    %24 = vector.load %arg4[%c0_13, %c0_14] : memref<8x256xf32, #tpu.memory_space<vmem>>, vector<8x256xf32>
    tpu.vector_store %arg4[%c0_13, %c0_14], %23 {strides = array<i32>} : memref<8x256xf32, #tpu.memory_space<vmem>>, vector<8x256xf32>,
    %c0_15 = arith.constant 0 : index
    %c0_16 = arith.constant 0 : index
    %25 = vector.load %arg5[%c0_15, %c0_16] : memref<8x256xf32, #tpu.memory_space<vmem>>, vector<8x256xf32>
    %26 = vector.shape_cast %19 : vector<64x256xf32> to vector<8x8x256xf32>
    %cst_17 = arith.constant dense<0.000000e+00> : vector<8x256xf32>
    %27 = vector.multi_reduction <add>, %26, %cst_17 [0] : vector<8x8x256xf32> to vector<8x256xf32>
    %28 = arith.addf %25, %27 : vector<8x256xf32>
    %c0_18 = arith.constant 0 : index
    %c0_19 = arith.constant 0 : index
    %29 = vector.load %arg5[%c0_18, %c0_19] : memref<8x256xf32, #tpu.memory_space<vmem>>, vector<8x256xf32>
    tpu.vector_store %arg5[%c0_18, %c0_19], %28 {strides = array<i32>} : memref<8x256xf32, #tpu.memory_space<vmem>>, vector<8x256xf32>,
    %30 = vector.extract_strided_slice %10 {offsets = [0, 0], sizes = [64, 128], strides = [1, 1]} : vector<64x256xf32> to vector<64x128xf32>
    %31 = vector.extract_strided_slice %10 {offsets = [0, 128], sizes = [64, 128], strides = [1, 1]} : vector<64x256xf32> to vector<64x128xf32>
    %32 = arith.addf %30, %31 : vector<64x128xf32>
    %c0_20 = arith.constant 0 : index
    %c0_21 = arith.constant 0 : index
    %33 = vector.load %arg6[%c0_20, %c0_21] : memref<64x128xf32, #tpu.memory_space<vmem>>, vector<64x128xf32>
    tpu.vector_store %arg6[%c0_20, %c0_21], %32 {strides = array<i32>} : memref<64x128xf32, #tpu.memory_space<vmem>>, vector<64x128xf32>,
    return
  }
  func.func @transform_0(%arg0: i32, %arg1: i32) -> (i32, i32) {
    %c2_i32 = arith.constant 2 : i32
    %0 = arith.muli %arg0, %c2_i32 : i32
    %1 = arith.addi %0, %arg1 : i32
    %c0_i32 = arith.constant 0 : i32
    %c0_i32_0 = arith.constant 0 : i32
    return %1, %c0_i32 : i32, i32
  }
  func.func @transform_1(%arg0: i32, %arg1: i32) -> (i32, i32) {
    %c2_i32 = arith.constant 2 : i32
    %0 = arith.muli %arg0, %c2_i32 : i32
    %1 = arith.addi %0, %arg1 : i32
    %c0_i32 = arith.constant 0 : i32
    %c0_i32_0 = arith.constant 0 : i32
    return %1, %c0_i32 : i32, i32
  }
  func.func @transform_2(%arg0: i32, %arg1: i32) -> (i32, i32) {
    %c0_i32 = arith.constant 0 : i32
    %c0_i32_0 = arith.constant 0 : i32
    return %arg0, %c0_i32 : i32, i32
  }
  func.func @transform_3(%arg0: i32, %arg1: i32) -> (i32, i32) {
    %c0_i32 = arith.constant 0 : i32
    %c0_i32_0 = arith.constant 0 : i32
    return %arg0, %c0_i32 : i32, i32
  }
  func.func @transform_4(%arg0: i32, %arg1: i32) -> (i32, i32) {
    %c2_i32 = arith.constant 2 : i32
    %0 = arith.muli %arg0, %c2_i32 : i32
    %1 = arith.addi %0, %arg1 : i32
    %c0_i32 = arith.constant 0 : i32
    %c0_i32_0 = arith.constant 0 : i32
    return %1, %c0_i32 : i32, i32
  }
}

</mosaic_0001>

<llo_original>
// kernel: tpu_custom_call.1
$region0: #{tpu_custom_call.1}
  #allocation0 [shape = 'u32[]', space=smem, size = 0x4, offset = 0x4, fixed_abs, tag = 'smem constant byte address 0x4 - core index']
  #allocation1 [shape = 'u32[72,128]{1,0:T(1,128)}', space=vmem, size = 0x9000, scoped, tag = 'internal scratch']
  %s0 = inlined_call_operand.hbm [shape: f32[256,256], index: 0, kind: input, shape index: {}]
  %s1 = inlined_call_operand.hbm [shape: f32[256,256], index: 1, kind: input, shape index: {}]
  %s2 = inlined_call_operand.hbm [shape: f32[16,256], index: 2, kind: output, shape index: {0}]
  %s3 = inlined_call_operand.hbm [shape: f32[16,256], index: 3, kind: output, shape index: {1}]
  %s4 = inlined_call_operand.hbm [shape: f32[256,128], index: 4, kind: output, shape index: {2}]
  %5 = xla_tuple %s2, %s3, %s4
  %s6 = sld [smem:[#allocation0]]
  $region69: #{tpu_custom_call.1} parent=0
    _
  %s8 = ssub.s32 1, %s6
  %s9 = scalar_select 0, %s8, %s6
  $region1: #{tpu_custom_call.1} parent=0
    #allocation2 [shape = 'u8[131072]{0}', space=vmem, size = 0x20000, scoped, tag = 'input window, operand 0']
    #allocation3 [shape = 's32[2]{0}', space=sflag, size = 0x8, scoped, tag = 'scoped memory for tpu_custom_call.1']
    #allocation4 [shape = 's32[2]{0}', space=sflag, size = 0x8, scoped, tag = 'scoped memory for tpu_custom_call.1']
    #allocation5 [shape = 'u8[131072]{0}', space=vmem, size = 0x20000, scoped, tag = 'input window, operand 1']
    #allocation6 [shape = 's32[2]{0}', space=sflag, size = 0x8, scoped, tag = 'scoped memory for tpu_custom_call.1']
    #allocation7 [shape = 'u8[16384]{0}', space=vmem, size = 0x4000, scoped, tag = 'output window, operand 0']
    #allocation8 [shape = 'u8[16384]{0}', space=vmem, size = 0x4000, scoped, tag = 'output window, operand 1']
    #allocation9 [shape = 's32[2]{0}', space=sflag, size = 0x8, scoped, tag = 'scoped memory for tpu_custom_call.1']
    #allocation10 [shape = 'u8[65536]{0}', space=vmem, size = 0x10000, scoped, tag = 'output window, operand 2']
    %10 = vsyncpa [#allocation3], 0
    %s11 = scalar_lea.sflag [#allocation3], 1
    %12 = vsyncpa %s11, 0
    %13 = vsyncpa [#allocation6], 0
    %s14 = scalar_lea.sflag [#allocation6], 1
    %15 = vsyncpa %s14, 0
    %16 = vsyncpa [#allocation4], 0
    %s17 = scalar_lea.sflag [#allocation4], 1
    %18 = vsyncpa %s17, 0
    %19 = vsyncpa [#allocation9], 0
    %s20 = scalar_lea.sflag [#allocation9], 1
    %21 = vsyncpa %s20, 0
    loop: start=0, step=1, limit=6
    $region2: #{tpu_custom_call.1} parent=1 // loop_pre_header
      _
    $region3: #{tpu_custom_call.1} parent=1 // loop_header
      %s23 = sphi 0, %s27
      %p24 = scmp.ge.s32.totalorder %s23, 6
      %s30 = sphi 0, %s42
      %s31 = sphi 0, %s38
      %s32 = sphi 0, %s30
      %s33 = sphi 0, %s31
      %s34 = sphi 0, %s32
      %s35 = sphi 0, %s33
      %s49 = sphi 0, %s51
      %s52 = sphi 0, %s49
      %s53 = sphi 0, %s52
      %s69 = sphi 0, %s53
      %s79 = sphi 0, %s81
      %s82 = sphi 0, %s79
      %s83 = sphi 0, %s82
      %s99 = sphi 0, %s83
      %s105 = sphi 0, %s107
      %s108 = sphi 0, %s105
      %s109 = sphi 0, %s108
      %s125 = sphi 0, %s109
      %s131 = sphi 0, %s133
      %s134 = sphi 0, %s131
      %s135 = sphi 0, %s134
      %s151 = sphi 0, %s135
      %s161 = sphi 0, %s163
      %s164 = sphi 0, %s161
      %s165 = sphi 0, %s164
      %s181 = sphi 0, %s165
    $region4: #{tpu_custom_call.1} parent=1 // loop_header_branch
      %26 = sbr.rel (%p24) target = $region8
    $region5: #{tpu_custom_call.1} parent=1 // loop_body
      %s28 = ssub.s32 %s23, 1
      %s29 = ssub.s32 %s23, 2
      %s36 = sadd.s32 1, %s31
      %p37 = scmp.ge.s32.totalorder %s36, 2
      %s38 = scalar_select %p37, 0, %s36
      %s39 = sadd.s32 1, %s30
      %s40 = scalar_select %p37, %s39, %s30
      %p41 = scmp.ge.s32.totalorder %s40, 2
      %s42 = scalar_select %p41, 0, %s40
      %s43 = smul.u32 %s30, 2
      %s44 = sadd.s32 %s43, %s31
      %s45 = smul.u32 %s42, 2
      %s46 = sadd.s32 %s45, %s38
      %s47 = ssub.s32 %s44, %s46
      %p48 = scmp.eq.s32.totalorder %s47, 0
      %s50 = sadd.s32 %s49, 1
      %s51 = scalar_select %p48, %s49, %s50
      %p54 = pneg %p48
      %p55 = scmp.eq.s32.totalorder %s23, 3
      %p56 = por %p54, %p55
      %p57 = scmp.ne.s32.totalorder %s49, %s52
      %p58 = scmp.eq.s32.totalorder %s23, 0
      %p59 = por %p57, %p58
      %p60 = scmp.ne.s32.totalorder %s49, %s52
      %p61 = scmp.eq.s32.totalorder %s28, 3
      %p62 = por %p60, %p61
      %p63 = scmp.ne.s32.totalorder %s52, %s53
      %p64 = scmp.eq.s32.totalorder %s28, 0
      %p65 = por %p63, %p64
      %p66 = scmp.ne.s32.totalorder %s52, %s53
      %p67 = scmp.eq.s32.totalorder %s29, 3
      %p68 = por %p66, %p67
      %p70 = scmp.ne.s32.totalorder %s53, %s69
      %p71 = scmp.eq.s32.totalorder %s29, 0
      %p72 = por %p70, %p71
      %s73 = smul.u32 %s30, 2
      %s74 = sadd.s32 %s73, %s31
      %s75 = smul.u32 %s42, 2
      %s76 = sadd.s32 %s75, %s38
      %s77 = ssub.s32 %s74, %s76
      %p78 = scmp.eq.s32.totalorder %s77, 0
      %s80 = sadd.s32 %s79, 1
      %s81 = scalar_select %p78, %s79, %s80
      %p84 = pneg %p78
      %p85 = scmp.eq.s32.totalorder %s23, 3
      %p86 = por %p84, %p85
      %p87 = scmp.ne.s32.totalorder %s79, %s82
      %p88 = scmp.eq.s32.totalorder %s23, 0
      %p89 = por %p87, %p88
      %p90 = scmp.ne.s32.totalorder %s79, %s82
      %p91 = scmp.eq.s32.totalorder %s28, 3
      %p92 = por %p90, %p91
      %p93 = scmp.ne.s32.totalorder %s82, %s83
      %p94 = scmp.eq.s32.totalorder %s28, 0
      %p95 = por %p93, %p94
      %p96 = scmp.ne.s32.totalorder %s82, %s83
      %p97 = scmp.eq.s32.totalorder %s29, 3
      %p98 = por %p96, %p97
      %p100 = scmp.ne.s32.totalorder %s83, %s99
      %p101 = scmp.eq.s32.totalorder %s29, 0
      %p102 = por %p100, %p101
      %s103 = ssub.s32 %s30, %s42
      %p104 = scmp.eq.s32.totalorder %s103, 0
      %s106 = sadd.s32 %s105, 1
      %s107 = scalar_select %p104, %s105, %s106
      %p110 = pneg %p104
      %p111 = scmp.eq.s32.totalorder %s23, 3
      %p112 = por %p110, %p111
      %p113 = scmp.ne.s32.totalorder %s105, %s108
      %p114 = scmp.eq.s32.totalorder %s23, 0
      %p115 = por %p113, %p114
      %p116 = scmp.ne.s32.totalorder %s105, %s108
      %p117 = scmp.eq.s32.totalorder %s28, 3
      %p118 = por %p116, %p117
      %p119 = scmp.ne.s32.totalorder %s108, %s109
      %p120 = scmp.eq.s32.totalorder %s28, 0
      %p121 = por %p119, %p120
      %p122 = scmp.ne.s32.totalorder %s108, %s109
      %p123 = scmp.eq.s32.totalorder %s29, 3
      %p124 = por %p122, %p123
      %p126 = scmp.ne.s32.totalorder %s109, %s125
      %p127 = scmp.eq.s32.totalorder %s29, 0
      %p128 = por %p126, %p127
      %s129 = ssub.s32 %s30, %s42
      %p130 = scmp.eq.s32.totalorder %s129, 0
      %s132 = sadd.s32 %s131, 1
      %s133 = scalar_select %p130, %s131, %s132
      %p136 = pneg %p130
      %p137 = scmp.eq.s32.totalorder %s23, 3
      %p138 = por %p136, %p137
      %p139 = scmp.ne.s32.totalorder %s131, %s134
      %p140 = scmp.eq.s32.totalorder %s23, 0
      %p141 = por %p139, %p140
      %p142 = scmp.ne.s32.totalorder %s131, %s134
      %p143 = scmp.eq.s32.totalorder %s28, 3
      %p144 = por %p142, %p143
      %p145 = scmp.ne.s32.totalorder %s134, %s135
      %p146 = scmp.eq.s32.totalorder %s28, 0
      %p147 = por %p145, %p146
      %p148 = scmp.ne.s32.totalorder %s134, %s135
      %p149 = scmp.eq.s32.totalorder %s29, 3
      %p150 = por %p148, %p149
      %p152 = scmp.ne.s32.totalorder %s135, %s151
      %p153 = scmp.eq.s32.totalorder %s29, 0
      %p154 = por %p152, %p153
      %s155 = smul.u32 %s30, 2
      %s156 = sadd.s32 %s155, %s31
      %s157 = smul.u32 %s42, 2
      %s158 = sadd.s32 %s157, %s38
      %s159 = ssub.s32 %s156, %s158
      %p160 = scmp.eq.s32.totalorder %s159, 0
      %s162 = sadd.s32 %s161, 1
      %s163 = scalar_select %p160, %s161, %s162
      %p166 = pneg %p160
      %p167 = scmp.eq.s32.totalorder %s23, 3
      %p168 = por %p166, %p167
      %p169 = scmp.ne.s32.totalorder %s161, %s164
      %p170 = scmp.eq.s32.totalorder %s23, 0
      %p171 = por %p169, %p170
      %p172 = scmp.ne.s32.totalorder %s161, %s164
      %p173 = scmp.eq.s32.totalorder %s28, 3
      %p174 = por %p172, %p173
      %p175 = scmp.ne.s32.totalorder %s164, %s165
      %p176 = scmp.eq.s32.totalorder %s28, 0
      %p177 = por %p175, %p176
      %p178 = scmp.ne.s32.totalorder %s164, %s165
      %p179 = scmp.eq.s32.totalorder %s29, 3
      %p180 = por %p178, %p179
      %p182 = scmp.ne.s32.totalorder %s165, %s181
      %p183 = scmp.eq.s32.totalorder %s29, 0
      %p184 = por %p182, %p183
      %p185 = scmp.le.s32.totalorder 1, %s23
      %p186 = scmp.lt.s32.totalorder %s23, 5
      %p187 = pnand %p185, %p186
      %p188 = pneg %p187
      // Predicated region
      $region9: #{tpu_custom_call.1} parent=5 // pred_check
        _
      $region10: #{tpu_custom_call.1} parent=5 // pred_check_branch
        %190 = sbr.rel (%p187) target = $region12
      $region11: #{tpu_custom_call.1} parent=5 // pred_region
        %s191 = ssub.s32 %s23, 1
      $region12: #{tpu_custom_call.1} parent=5 // pred_fallthru
        _
      %p192 = scmp.lt.s32.totalorder %s23, 4
      // Predicated region
      $region13: #{tpu_custom_call.1} parent=5 // pred_check
        %p193 = pneg %p192
      $region14: #{tpu_custom_call.1} parent=5 // pred_check_branch
        %195 = sbr.rel (%p193) target = $region16
      $region15: #{tpu_custom_call.1} parent=5 // pred_region
        // Predicated region
        $region17: #{tpu_custom_call.1} parent=15 // pred_check
          %p196 = pneg %p59
        $region18: #{tpu_custom_call.1} parent=15 // pred_check_branch
          %198 = sbr.rel (%p196) target = $region20
        $region19: #{tpu_custom_call.1} parent=15 // pred_region
          %s199 = sand.u32 %s49, 1
          %s200 = scalar_lea.sflag [#allocation3], %s199
          %s201 = sand.u32 %s49, 1
          %s202 = smul.addr %s201, 128
          %s203 = scalar_lea.vmem [#allocation2], %s202
          %s204 = smul.u32 %s30, 2
          %s205 = sadd.s32 %s204, %s31
          %s206 = smul.u32 8, %s205
          %208 = vsyncadd %s200, 0
          %s209 = smul.addr %s206, 2
          %s210 = smul.addr %s209, 8
          %s211 = scalar_lea.hbm %s0, %s210
          %s212 = sshll.u32 %s211, 4
          %s213 = int_to_ptr.hbm [resolvable:$true] %s212
          %s214 = sshll.u32 %s203, 4
          %s215 = int_to_ptr.vmem [resolvable:$true] %s214
          %220 = dma.hbm_to_vmem [thread:$0]  %s213, 2048, %s215, %s200, 256, 256, 16
        $region20: #{tpu_custom_call.1} parent=15 // pred_fallthru
          _
        // Predicated region
        $region21: #{tpu_custom_call.1} parent=15 // pred_check
          %p221 = pneg %p89
        $region22: #{tpu_custom_call.1} parent=15 // pred_check_branch
          %223 = sbr.rel (%p221) target = $region24
        $region23: #{tpu_custom_call.1} parent=15 // pred_region
          %s224 = sand.u32 %s79, 1
          %s225 = scalar_lea.sflag [#allocation6], %s224
          %s226 = sand.u32 %s79, 1
          %s227 = smul.addr %s226, 128
          %s228 = scalar_lea.vmem [#allocation5], %s227
          %s229 = smul.u32 %s30, 2
          %s230 = sadd.s32 %s229, %s31
          %s231 = smul.u32 8, %s230
          %233 = vsyncadd %s225, 0
          %s234 = smul.addr %s231, 2
          %s235 = smul.addr %s234, 8
          %s236 = scalar_lea.hbm %s1, %s235
          %s237 = sshll.u32 %s236, 4
          %s238 = int_to_ptr.hbm [resolvable:$true] %s237
          %s239 = sshll.u32 %s228, 4
          %s240 = int_to_ptr.vmem [resolvable:$true] %s239
          %245 = dma.hbm_to_vmem [thread:$0]  %s238, 2048, %s240, %s225, 256, 256, 16
        $region24: #{tpu_custom_call.1} parent=15 // pred_fallthru
          _
      $region16: #{tpu_custom_call.1} parent=5 // pred_fallthru
        _
      %p246 = scmp.le.s32.totalorder 1, %s23
      %p247 = scmp.lt.s32.totalorder %s23, 5
      %p248 = pnand %p246, %p247
      %p249 = pneg %p248
      // Predicated region
      $region25: #{tpu_custom_call.1} parent=5 // pred_check
        _
      $region26: #{tpu_custom_call.1} parent=5 // pred_check_branch
        %251 = sbr.rel (%p248) target = $region28
      $region27: #{tpu_custom_call.1} parent=5 // pred_region
        %s252 = ssub.s32 %s23, 1
        %s253 = sand.u32 %s52, 1
        %s254 = scalar_lea.sflag [#allocation3], %s253
        %s255 = sand.u32 %s52, 1
        %s256 = smul.addr %s255, 128
        %s257 = scalar_lea.vmem [#allocation2], %s256
        // Predicated region
        $region29: #{tpu_custom_call.1} parent=27 // pred_check
          %p258 = pneg %p65
        $region30: #{tpu_custom_call.1} parent=27 // pred_check_branch
          %260 = sbr.rel (%p258) target = $region32
        $region31: #{tpu_custom_call.1} parent=27 // pred_region
          %262 = dma.done %s254, 2048
        $region32: #{tpu_custom_call.1} parent=27 // pred_fallthru
          _
        %s263 = sand.u32 %s82, 1
        %s264 = scalar_lea.sflag [#allocation6], %s263
        %s265 = sand.u32 %s82, 1
        %s266 = smul.addr %s265, 128
        %s267 = scalar_lea.vmem [#allocation5], %s266
        // Predicated region
        $region33: #{tpu_custom_call.1} parent=27 // pred_check
          %p268 = pneg %p95
        $region34: #{tpu_custom_call.1} parent=27 // pred_check_branch
          %270 = sbr.rel (%p268) target = $region36
        $region35: #{tpu_custom_call.1} parent=27 // pred_region
          %272 = dma.done %s264, 2048
        $region36: #{tpu_custom_call.1} parent=27 // pred_fallthru
          _
        %s273 = sand.u32 %s52, 1
        %s274 = scalar_lea.sflag [#allocation3], %s273
        %s275 = sand.u32 %s52, 1
        %s276 = smul.addr %s275, 128
        %s277 = scalar_lea.vmem [#allocation2], %s276
        %p278 = pneg %p65
        %p279 = pneg %p62
        %s280 = sand.u32 %s82, 1
        %s281 = scalar_lea.sflag [#allocation6], %s280
        %s282 = sand.u32 %s82, 1
        %s283 = smul.addr %s282, 128
        %s284 = scalar_lea.vmem [#allocation5], %s283
        %p285 = pneg %p95
        %p286 = pneg %p92
        %p287 = pneg %p121
        %p288 = pneg %p118
        %s289 = sand.u32 %s108, 1
        %s290 = scalar_lea.sflag [#allocation4], %s289
        %s291 = sand.u32 %s108, 1
        %s292 = smul.addr %s291, 16
        %s293 = scalar_lea.vmem [#allocation7], %s292
        %p294 = pneg %p147
        %p295 = pneg %p144
        %s296 = sand.u32 %s28, 1
        %s297 = scalar_lea.sflag [#allocation9], %s296
        %s298 = sand.u32 %s134, 1
        %s299 = smul.addr %s298, 16
        %s300 = scalar_lea.vmem [#allocation8], %s299
        %p301 = pneg %p177
        %p302 = pneg %p174
        %s303 = sand.u32 %s28, 1
        %s304 = scalar_lea.sflag [#allocation9], %s303
        %s305 = sand.u32 %s164, 1
        %s306 = smul.addr %s305, 64
        %s307 = scalar_lea.vmem [#allocation10], %s306
        %s308 = smul.u32 %s32, 2
        %s309 = sadd.s32 %s308, %s33
        %s310 = smul.u32 8, %s309
        %s311 = smul.u32 %s32, 2
        %s312 = sadd.s32 %s311, %s33
        %s313 = smul.u32 8, %s312
        %s314 = smul.u32 %s32, 2
        %s315 = sadd.s32 %s314, %s33
        %s316 = smul.u32 8, %s315
        %p317 = scmp.eq.s32.totalorder %s33, 0
        // Predicated region
        $region37: #{tpu_custom_call.1} parent=27 // pred_check
          %p318 = pneg %p317
        $region38: #{tpu_custom_call.1} parent=27 // pred_check_branch
          %320 = sbr.rel (%p318) target = $region40
        $region39: #{tpu_custom_call.1} parent=27 // pred_region
          %321 = vst [vmem:[%s293] sm:$0xff] 0.0
          %322 = vst [vmem:[%s293 + $0x8] sm:$0xff] 0.0
          %323 = vst [vmem:[%s300] sm:$0xff] 0.0
          %324 = vst [vmem:[%s300 + $0x8] sm:$0xff] 0.0
        $region40: #{tpu_custom_call.1} parent=27 // pred_fallthru
          _
        %v325 = vld [vmem:[%s257] sm:$0xff]
        %v326 = vld [vmem:[%s257 + $0x8] sm:$0xff]
        %v327 = vld [vmem:[%s257 + $0x10] sm:$0xff]
        %v328 = vld [vmem:[%s257 + $0x18] sm:$0xff]
        %v329 = vld [vmem:[%s257 + $0x20] sm:$0xff]
        %v330 = vld [vmem:[%s257 + $0x28] sm:$0xff]
        %v331 = vld [vmem:[%s257 + $0x30] sm:$0xff]
        %v332 = vld [vmem:[%s257 + $0x38] sm:$0xff]
        %v333 = vld [vmem:[%s257 + $0x40] sm:$0xff]
        %v334 = vld [vmem:[%s257 + $0x48] sm:$0xff]
        %v335 = vld [vmem:[%s257 + $0x50] sm:$0xff]
        %v336 = vld [vmem:[%s257 + $0x58] sm:$0xff]
        %v337 = vld [vmem:[%s257 + $0x60] sm:$0xff]
        %v338 = vld [vmem:[%s257 + $0x68] sm:$0xff]
        %v339 = vld [vmem:[%s257 + $0x70] sm:$0xff]
        %v340 = vld [vmem:[%s257 + $0x78] sm:$0xff]
        %v341 = vld [vmem:[%s267] sm:$0xff]
        %v342 = vld [vmem:[%s267 + $0x8] sm:$0xff]
        %v343 = vld [vmem:[%s267 + $0x10] sm:$0xff]
        %v344 = vld [vmem:[%s267 + $0x18] sm:$0xff]
        %v345 = vld [vmem:[%s267 + $0x20] sm:$0xff]
        %v346 = vld [vmem:[%s267 + $0x28] sm:$0xff]
        %v347 = vld [vmem:[%s267 + $0x30] sm:$0xff]
        %v348 = vld [vmem:[%s267 + $0x38] sm:$0xff]
        %v349 = vld [vmem:[%s267 + $0x40] sm:$0xff]
        %v350 = vld [vmem:[%s267 + $0x48] sm:$0xff]
        %v351 = vld [vmem:[%s267 + $0x50] sm:$0xff]
        %v352 = vld [vmem:[%s267 + $0x58] sm:$0xff]
        %v353 = vld [vmem:[%s267 + $0x60] sm:$0xff]
        %v354 = vld [vmem:[%s267 + $0x68] sm:$0xff]
        %v355 = vld [vmem:[%s267 + $0x70] sm:$0xff]
        %v356 = vld [vmem:[%s267 + $0x78] sm:$0xff]
        %vm357 = vcmp.eq.f32.partialorder %v325, 0.0
        %vm358 = vcmp.eq.f32.partialorder %v326, 0.0
        %vm359 = vcmp.eq.f32.partialorder %v327, 0.0
        %vm360 = vcmp.eq.f32.partialorder %v328, 0.0
        %vm361 = vcmp.eq.f32.partialorder %v329, 0.0
        %vm362 = vcmp.eq.f32.partialorder %v330, 0.0
        %vm363 = vcmp.eq.f32.partialorder %v331, 0.0
        %vm364 = vcmp.eq.f32.partialorder %v332, 0.0
        %vm365 = vcmp.eq.f32.partialorder %v333, 0.0
        %vm366 = vcmp.eq.f32.partialorder %v334, 0.0
        %vm367 = vcmp.eq.f32.partialorder %v335, 0.0
        %vm368 = vcmp.eq.f32.partialorder %v336, 0.0
        %vm369 = vcmp.eq.f32.partialorder %v337, 0.0
        %vm370 = vcmp.eq.f32.partialorder %v338, 0.0
        %vm371 = vcmp.eq.f32.partialorder %v339, 0.0
        %vm372 = vcmp.eq.f32.partialorder %v340, 0.0
        %v373 = vsub.f32 %v341, %v325
        %v374 = vsub.f32 %v342, %v326
        %v375 = vsub.f32 %v343, %v327
        %v376 = vsub.f32 %v344, %v328
        %v377 = vsub.f32 %v345, %v329
        %v378 = vsub.f32 %v346, %v330
        %v379 = vsub.f32 %v347, %v331
        %v380 = vsub.f32 %v348, %v332
        %v381 = vsub.f32 %v349, %v333
        %v382 = vsub.f32 %v350, %v334
        %v383 = vsub.f32 %v351, %v335
        %v384 = vsub.f32 %v352, %v336
        %v385 = vsub.f32 %v353, %v337
        %v386 = vsub.f32 %v354, %v338
        %v387 = vsub.f32 %v355, %v339
        %v388 = vsub.f32 %v356, %v340
        %v389 = vand.u32 2147483647, %v373
        %v390 = vand.u32 2147483647, %v374
        %v391 = vand.u32 2147483647, %v375
        %v392 = vand.u32 2147483647, %v376
        %v393 = vand.u32 2147483647, %v377
        %v394 = vand.u32 2147483647, %v378
        %v395 = vand.u32 2147483647, %v379
        %v396 = vand.u32 2147483647, %v380
        %v397 = vand.u32 2147483647, %v381
        %v398 = vand.u32 2147483647, %v382
        %v399 = vand.u32 2147483647, %v383
        %v400 = vand.u32 2147483647, %v384
        %v401 = vand.u32 2147483647, %v385
        %v402 = vand.u32 2147483647, %v386
        %v403 = vand.u32 2147483647, %v387
        %v404 = vand.u32 2147483647, %v388
        %v405 = vsel %vm357, 0.0, %v389
        %v406 = vsel %vm358, 0.0, %v390
        %v407 = vsel %vm359, 0.0, %v391
        %v408 = vsel %vm360, 0.0, %v392
        %v409 = vsel %vm361, 0.0, %v393
        %v410 = vsel %vm362, 0.0, %v394
        %v411 = vsel %vm363, 0.0, %v395
        %v412 = vsel %vm364, 0.0, %v396
        %v413 = vsel %vm365, 0.0, %v397
        %v414 = vsel %vm366, 0.0, %v398
        %v415 = vsel %vm367, 0.0, %v399
        %v416 = vsel %vm368, 0.0, %v400
        %v417 = vsel %vm369, 0.0, %v401
        %v418 = vsel %vm370, 0.0, %v402
        %v419 = vsel %vm371, 0.0, %v403
        %v420 = vsel %vm372, 0.0, %v404
        %v421 = vmax.f32 %v325, 0.0003100996
        %v422 = vmax.f32 %v326, 0.0003100996
        %v423 = vmax.f32 %v327, 0.0003100996
        %v424 = vmax.f32 %v328, 0.0003100996
        %v425 = vmax.f32 %v329, 0.0003100996
        %v426 = vmax.f32 %v330, 0.0003100996
        %v427 = vmax.f32 %v331, 0.0003100996
        %v428 = vmax.f32 %v332, 0.0003100996
        %v429 = vmax.f32 %v333, 0.0003100996
        %v430 = vmax.f32 %v334, 0.0003100996
        %v431 = vmax.f32 %v335, 0.0003100996
        %v432 = vmax.f32 %v336, 0.0003100996
        %v433 = vmax.f32 %v337, 0.0003100996
        %v434 = vmax.f32 %v338, 0.0003100996
        %v435 = vmax.f32 %v339, 0.0003100996
        %v436 = vmax.f32 %v340, 0.0003100996
        %v437 = vmin.f32 %v421, 1.0
        %v438 = vmin.f32 %v422, 1.0
        %v439 = vmin.f32 %v423, 1.0
        %v440 = vmin.f32 %v424, 1.0
        %v441 = vmin.f32 %v425, 1.0
        %v442 = vmin.f32 %v426, 1.0
        %v443 = vmin.f32 %v427, 1.0
        %v444 = vmin.f32 %v428, 1.0
        %v445 = vmin.f32 %v429, 1.0
        %v446 = vmin.f32 %v430, 1.0
        %v447 = vmin.f32 %v431, 1.0
        %v448 = vmin.f32 %v432, 1.0
        %v449 = vmin.f32 %v433, 1.0
        %v450 = vmin.f32 %v434, 1.0
        %v451 = vmin.f32 %v435, 1.0
        %v452 = vmin.f32 %v436, 1.0
        %vm453 = vcmp.gt.f32.partialorder %v325, 0.0
        %vm454 = vcmp.gt.f32.partialorder %v326, 0.0
        %vm455 = vcmp.gt.f32.partialorder %v327, 0.0
        %vm456 = vcmp.gt.f32.partialorder %v328, 0.0
        %vm457 = vcmp.gt.f32.partialorder %v329, 0.0
        %vm458 = vcmp.gt.f32.partialorder %v330, 0.0
        %vm459 = vcmp.gt.f32.partialorder %v331, 0.0
        %vm460 = vcmp.gt.f32.partialorder %v332, 0.0
        %vm461 = vcmp.gt.f32.partialorder %v333, 0.0
        %vm462 = vcmp.gt.f32.partialorder %v334, 0.0
        %vm463 = vcmp.gt.f32.partialorder %v335, 0.0
        %vm464 = vcmp.gt.f32.partialorder %v336, 0.0
        %vm465 = vcmp.gt.f32.partialorder %v337, 0.0
        %vm466 = vcmp.gt.f32.partialorder %v338, 0.0
        %vm467 = vcmp.gt.f32.partialorder %v339, 0.0
        %vm468 = vcmp.gt.f32.partialorder %v340, 0.0
        %v469 = vsel %vm453, 1.0, 0.0
        %v470 = vsel %vm454, 1.0, 0.0
        %v471 = vsel %vm455, 1.0, 0.0
        %v472 = vsel %vm456, 1.0, 0.0
        %v473 = vsel %vm457, 1.0, 0.0
        %v474 = vsel %vm458, 1.0, 0.0
        %v475 = vsel %vm459, 1.0, 0.0
        %v476 = vsel %vm460, 1.0, 0.0
        %v477 = vsel %vm461, 1.0, 0.0
        %v478 = vsel %vm462, 1.0, 0.0
        %v479 = vsel %vm463, 1.0, 0.0
        %v480 = vsel %vm464, 1.0, 0.0
        %v481 = vsel %vm465, 1.0, 0.0
        %v482 = vsel %vm466, 1.0, 0.0
        %v483 = vsel %vm467, 1.0, 0.0
        %v484 = vsel %vm468, 1.0, 0.0
        %v485 = vld [vmem:[%s293] sm:$0xff]
        %v486 = vld [vmem:[%s293 + $0x8] sm:$0xff]
        %v487 = vadd.f32 %v437, %v439
        %v488 = vadd.f32 %v487, %v441
        %v489 = vadd.f32 %v488, %v443
        %v490 = vadd.f32 %v489, %v445
        %v491 = vadd.f32 %v490, %v447
        %v492 = vadd.f32 %v491, %v449
        %v493 = vadd.f32 %v492, %v451
        %v494 = vadd.f32 %v438, %v440
        %v495 = vadd.f32 %v494, %v442
        %v496 = vadd.f32 %v495, %v444
        %v497 = vadd.f32 %v496, %v446
        %v498 = vadd.f32 %v497, %v448
        %v499 = vadd.f32 %v498, %v450
        %v500 = vadd.f32 %v499, %v452
        %v501 = vadd.f32 %v485, %v493
        %v502 = vadd.f32 %v486, %v500
        %503 = vst [vmem:[%s293] sm:$0xff] %v501
        %504 = vst [vmem:[%s293 + $0x8] sm:$0xff] %v502
        %v505 = vld [vmem:[%s300] sm:$0xff]
        %v506 = vld [vmem:[%s300 + $0x8] sm:$0xff]
        %v507 = vadd.f32 %v469, %v471
        %v508 = vadd.f32 %v507, %v473
        %v509 = vadd.f32 %v508, %v475
        %v510 = vadd.f32 %v509, %v477
        %v511 = vadd.f32 %v510, %v479
        %v512 = vadd.f32 %v511, %v481
        %v513 = vadd.f32 %v512, %v483
        %v514 = vadd.f32 %v470, %v472
        %v515 = vadd.f32 %v514, %v474
        %v516 = vadd.f32 %v515, %v476
        %v517 = vadd.f32 %v516, %v478
        %v518 = vadd.f32 %v517, %v480
        %v519 = vadd.f32 %v518, %v482
        %v520 = vadd.f32 %v519, %v484
        %v521 = vadd.f32 %v505, %v513
        %v522 = vadd.f32 %v506, %v520
        %523 = vst [vmem:[%s300] sm:$0xff] %v521
        %524 = vst [vmem:[%s300 + $0x8] sm:$0xff] %v522
        %v525 = vadd.f32 %v405, %v406
        %v526 = vadd.f32 %v407, %v408
        %v527 = vadd.f32 %v409, %v410
        %v528 = vadd.f32 %v411, %v412
        %v529 = vadd.f32 %v413, %v414
        %v530 = vadd.f32 %v415, %v416
        %v531 = vadd.f32 %v417, %v418
        %v532 = vadd.f32 %v419, %v420
        %533 = vst [vmem:[%s307] sm:$0xff] %v525
        %534 = vst [vmem:[%s307 + $0x8] sm:$0xff] %v526
        %535 = vst [vmem:[%s307 + $0x10] sm:$0xff] %v527
        %536 = vst [vmem:[%s307 + $0x18] sm:$0xff] %v528
        %537 = vst [vmem:[%s307 + $0x20] sm:$0xff] %v529
        %538 = vst [vmem:[%s307 + $0x28] sm:$0xff] %v530
        %539 = vst [vmem:[%s307 + $0x30] sm:$0xff] %v531
        %540 = vst [vmem:[%s307 + $0x38] sm:$0xff] %v532
        %s541 = sand.u32 %s108, 1
        %s542 = scalar_lea.sflag [#allocation4], %s541
        %s543 = sand.u32 %s108, 1
        %s544 = smul.addr %s543, 16
        %s545 = scalar_lea.vmem [#allocation7], %s544
        %s546 = sand.u32 %s28, 1
        %s547 = scalar_lea.sflag [#allocation9], %s546
        %s548 = sand.u32 %s134, 1
        %s549 = smul.addr %s548, 16
        %s550 = scalar_lea.vmem [#allocation8], %s549
        %s551 = sand.u32 %s28, 1
        %s552 = scalar_lea.sflag [#allocation9], %s551
        %s553 = sand.u32 %s164, 1
        %s554 = smul.addr %s553, 64
        %s555 = scalar_lea.vmem [#allocation10], %s554
        // Predicated region
        $region41: #{tpu_custom_call.1} parent=27 // pred_check
          %p556 = pneg %p118
        $region42: #{tpu_custom_call.1} parent=27 // pred_check_branch
          %558 = sbr.rel (%p556) target = $region44
        $region43: #{tpu_custom_call.1} parent=27 // pred_region
          %560 = vsyncadd %s542, 0
          %s561 = smul.addr %s32, 2
          %s562 = smul.addr %s561, 8
          %s563 = scalar_lea.hbm %s2, %s562
          %s565 = sshll.u32 %s545, 4
          %s566 = int_to_ptr.vmem [resolvable:$true] %s565
          %s567 = sshll.u32 %s563, 4
          %s568 = int_to_ptr.hbm [resolvable:$true] %s567
          %570 = dma.vmem_to_hbm [thread:$0]  %s566, 256, %s568, %s542
        $region44: #{tpu_custom_call.1} parent=27 // pred_fallthru
          _
        // Predicated region
        $region45: #{tpu_custom_call.1} parent=27 // pred_check
          %p571 = pneg %p144
        $region46: #{tpu_custom_call.1} parent=27 // pred_check_branch
          %573 = sbr.rel (%p571) target = $region48
        $region47: #{tpu_custom_call.1} parent=27 // pred_region
          %575 = vsyncadd %s547, 0
          %s576 = smul.addr %s32, 2
          %s577 = smul.addr %s576, 8
          %s578 = scalar_lea.hbm %s3, %s577
          %s580 = sshll.u32 %s550, 4
          %s581 = int_to_ptr.vmem [resolvable:$true] %s580
          %s582 = sshll.u32 %s578, 4
          %s583 = int_to_ptr.hbm [resolvable:$true] %s582
          %585 = dma.vmem_to_hbm [thread:$0]  %s581, 256, %s583, %s547
        $region48: #{tpu_custom_call.1} parent=27 // pred_fallthru
          _
        // Predicated region
        $region49: #{tpu_custom_call.1} parent=27 // pred_check
          %p586 = pneg %p174
        $region50: #{tpu_custom_call.1} parent=27 // pred_check_branch
          %588 = sbr.rel (%p586) target = $region52
        $region51: #{tpu_custom_call.1} parent=27 // pred_region
          %s589 = smul.u32 %s32, 2
          %s590 = sadd.s32 %s589, %s33
          %s591 = smul.u32 8, %s590
          %593 = vsyncadd %s552, 0
          %s594 = smul.addr %s591, 8
          %s595 = scalar_lea.hbm %s4, %s594
          %s596 = sshll.u32 %s555, 4
          %s597 = int_to_ptr.vmem [resolvable:$true] %s596
          %s598 = sshll.u32 %s595, 4
          %s599 = int_to_ptr.hbm [resolvable:$true] %s598
          %604 = dma.vmem_to_hbm [thread:$0]  %s597, 1024, %s599, %s552, 128, 128, 8
        $region52: #{tpu_custom_call.1} parent=27 // pred_fallthru
          _
      $region28: #{tpu_custom_call.1} parent=5 // pred_fallthru
        _
      %p605 = scmp.le.s32.totalorder 2, %s23
      // Predicated region
      $region53: #{tpu_custom_call.1} parent=5 // pred_check
        %p606 = pneg %p605
      $region54: #{tpu_custom_call.1} parent=5 // pred_check_branch
        %608 = sbr.rel (%p606) target = $region56
      $region55: #{tpu_custom_call.1} parent=5 // pred_region
        %s609 = ssub.s32 %s23, 2
        // Predicated region
        $region57: #{tpu_custom_call.1} parent=55 // pred_check
          %p610 = pneg %p124
        $region58: #{tpu_custom_call.1} parent=55 // pred_check_branch
          %612 = sbr.rel (%p610) target = $region60
        $region59: #{tpu_custom_call.1} parent=55 // pred_region
          %s613 = sand.u32 %s109, 1
          %s614 = scalar_lea.sflag [#allocation4], %s613
          %s615 = sand.u32 %s109, 1
          %s616 = smul.addr %s615, 16
          %s617 = scalar_lea.vmem [#allocation7], %s616
          %619 = dma.done %s614, 256
        $region60: #{tpu_custom_call.1} parent=55 // pred_fallthru
          _
        // Predicated region
        $region61: #{tpu_custom_call.1} parent=55 // pred_check
          %p620 = pneg %p150
        $region62: #{tpu_custom_call.1} parent=55 // pred_check_branch
          %622 = sbr.rel (%p620) target = $region64
        $region63: #{tpu_custom_call.1} parent=55 // pred_region
          %s623 = sand.u32 %s29, 1
          %s624 = scalar_lea.sflag [#allocation9], %s623
          %s625 = sand.u32 %s135, 1
          %s626 = smul.addr %s625, 16
          %s627 = scalar_lea.vmem [#allocation8], %s626
          %629 = dma.done %s624, 256
        $region64: #{tpu_custom_call.1} parent=55 // pred_fallthru
          _
        // Predicated region
        $region65: #{tpu_custom_call.1} parent=55 // pred_check
          %p630 = pneg %p180
        $region66: #{tpu_custom_call.1} parent=55 // pred_check_branch
          %632 = sbr.rel (%p630) target = $region68
        $region67: #{tpu_custom_call.1} parent=55 // pred_region
          %s633 = sand.u32 %s29, 1
          %s634 = scalar_lea.sflag [#allocation9], %s633
          %s635 = sand.u32 %s165, 1
          %s636 = smul.addr %s635, 64
          %s637 = scalar_lea.vmem [#allocation10], %s636
          %639 = dma.done %s634, 1024
        $region68: #{tpu_custom_call.1} parent=55 // pred_fallthru
          _
      $region56: #{tpu_custom_call.1} parent=5 // pred_fallthru
        _
    $region6: #{tpu_custom_call.1} parent=1 // loop_footer
      %s27 = sadd.s32 1, %s23
    $region7: #{tpu_custom_call.1} parent=1 // loop_footer_branch
      %22 = sbr.rel target = $region3
    $region8: #{tpu_custom_call.1} parent=1 // loop_exit
      _
    %640 = vsyncpa [#allocation3], 1
    %s641 = scalar_lea.sflag [#allocation3], 1
    %642 = vsyncpa %s641, 1
    %643 = vsyncpa [#allocation6], 1
    %s644 = scalar_lea.sflag [#allocation6], 1
    %645 = vsyncpa %s644, 1
    %646 = vsyncpa [#allocation4], 1
    %s647 = scalar_lea.sflag [#allocation4], 1
    %648 = vsyncpa %s647, 1
    %649 = vsyncpa [#allocation9], 1
    %s650 = scalar_lea.sflag [#allocation9], 1
    %651 = vsyncpa %s650, 1

</llo_original>
